<compile_context>
chip_gen: v7x
topology: tpu7x:2x2x1
jax: 0.10.0
libtpu: 0.0.40
codegen_flags: <defaults>
</compile_context>

<pallas_src>
import jax
import jax.numpy as jnp
from jax.experimental import pallas as pl
from jax.experimental.pallas import tpu as pltpu

CLIP_MEAN = (0.48145466, 0.4578275, 0.40821073)
CLIP_STD = (0.26862954, 0.26130258, 0.27577711)


def _round_up(x, m):
    return ((x + m - 1) // m) * m


# ----------------------------------------------------------------------------
# Fused kernel:
#   feat = x @ W_enc' + b_enc'      (K-tiled over D_in, f32 VMEM accumulator)
#   out  = feat @ W_pcbm + b_cls    (collapsed linear PCBM head, lane-dense output)
# grid = (batch tiles [parallel], K tiles [arbitrary, last])
# ----------------------------------------------------------------------------
def fused_kernel(x_ref, wenc_ref, benc_ref, wpcbm_ref, bcls_ref, out_ref, feat_acc):
    k = pl.program_id(1)

    @pl.when(k == 0)
    def _init():
        feat_acc[...] = jnp.zeros_like(feat_acc)

    # encoder partial product on the MXU (bf16 inputs, f32 accumulation)
    feat_acc[...] += jnp.dot(
        x_ref[...], wenc_ref[...], preferred_element_type=jnp.float32
    )

    @pl.when(k == pl.num_programs(1) - 1)
    def _finalize():
        feat = feat_acc[...] + benc_ref[...]  # f32 features (mirrors features.float())
        out_ref[...] = (
            jnp.dot(
                feat.astype(jnp.bfloat16),
                wpcbm_ref[...],
                preferred_element_type=jnp.float32,
            )
            + bcls_ref[...]
        )


def fused_forward(x_pad, w_enc, b_enc, w_pcbm, b_cls, *, tb, tk):
    B_pad, D_in_pad = x_pad.shape
    D_emb_pad = w_enc.shape[1]
    N_cls_pad = w_pcbm.shape[1]
    grid = (B_pad // tb, D_in_pad // tk)
    return pl.pallas_call(
        fused_kernel,
        out_shape=jax.ShapeDtypeStruct((B_pad, N_cls_pad), jnp.float32),
        grid_spec=pltpu.PrefetchScalarGridSpec(
            num_scalar_prefetch=0,
            grid=grid,
            in_specs=[
                pl.BlockSpec((tb, tk), lambda b, k: (b, k)),           # x
                pl.BlockSpec((tk, D_emb_pad), lambda b, k: (k, 0)),    # W_enc'
                pl.BlockSpec((1, D_emb_pad), lambda b, k: (0, 0)),     # b_enc'
                pl.BlockSpec((D_emb_pad, N_cls_pad), lambda b, k: (0, 0)),  # W_pcbm
                pl.BlockSpec((1, N_cls_pad), lambda b, k: (0, 0)),     # b_cls
            ],
            out_specs=pl.BlockSpec((tb, N_cls_pad), lambda b, k: (b, 0)),
            scratch_shapes=[pltpu.VMEM((tb, D_emb_pad), jnp.float32)],
        ),
        compiler_params=pltpu.CompilerParams(
            dimension_semantics=("parallel", "arbitrary"),
        ),
    )(x_pad, w_enc, b_enc, w_pcbm, b_cls)


# ----------------------------------------------------------------------------
# Parameters
# ----------------------------------------------------------------------------
def make_params(key, C, H, W, d_embed, n_concepts, n_classes):
    """Original ('torch-layout') parameters of the synthetic encoder + PCBM."""
    D_in = C * H * W
    k1, k2, k3, k4, k5 = jax.random.split(key, 5)
    return {
        # synthetic linear image encoder (stand-in for clip_model.encode_image)
        "w_enc": 0.02 * jax.random.normal(k1, (D_in, d_embed), jnp.float32),
        "b_enc": 0.01 * jax.random.normal(k2, (d_embed,), jnp.float32),
        # PCBM: concept bank (n_concepts, d_embed), classifier (n_classes, n_concepts)
        "cvecs": 0.1 * jax.random.normal(k3, (n_concepts, d_embed), jnp.float32),
        "wcls": 0.1 * jax.random.normal(k4, (n_classes, n_concepts), jnp.float32),
        "b_cls": 0.01 * jax.random.normal(k5, (n_classes,), jnp.float32),
    }


def prepare_kernel_params(params, C, H, W, *, tk=256):
    """Fold CLIP normalization into the encoder affine, collapse the linear PCBM head,
    pad to lane/sublane-friendly shapes, and cast MXU operands to bf16."""
    D_in, d_embed = params["w_enc"].shape
    n_classes = params["b_cls"].shape[0]

    # 1) fold Normalize(mean, std):  ((x-m)/s) @ W + b == x @ (W/s[:,None]) + (b - (m/s)@W)
    mean_flat = jnp.repeat(jnp.asarray(CLIP_MEAN, jnp.float32), H * W)       # (D_in,)
    stdinv_flat = jnp.repeat(1.0 / jnp.asarray(CLIP_STD, jnp.float32), H * W)
    w_enc_f = params["w_enc"] * stdinv_flat[:, None]
    b_enc_f = params["b_enc"] - (mean_flat * stdinv_flat) @ params["w_enc"]

    # 2) collapse the linear PCBM head (return_dist=False): (f @ C^T) @ Wc^T == f @ (C^T Wc^T)
    w_pcbm = params["cvecs"].T @ params["wcls"].T                            # (d_embed, n_classes)

    # 3) pad: lane dims -> multiples of 128, reduction dim -> multiple of the K tile
    D_in_pad = _round_up(D_in, tk)
    D_emb_pad = _round_up(d_embed, 128)
    N_cls_pad = _round_up(n_classes, 128)

    w_enc_p = jnp.zeros((D_in_pad, D_emb_pad), jnp.float32).at[:D_in, :d_embed].set(w_enc_f)
    b_enc_p = jnp.zeros((1, D_emb_pad), jnp.float32).at[0, :d_embed].set(b_enc_f)
    w_pcbm_p = jnp.zeros((D_emb_pad, N_cls_pad), jnp.float32).at[:d_embed, :n_classes].set(w_pcbm)
    b_cls_p = jnp.zeros((1, N_cls_pad), jnp.float32).at[0, :n_classes].set(params["b_cls"])

    return {
        "w_enc": w_enc_p.astype(jnp.bfloat16),   # bf16 MXU operand
        "b_enc": b_enc_p,                        # f32 (added to f32 accumulator)
        "w_pcbm": w_pcbm_p.astype(jnp.bfloat16),
        "b_cls": b_cls_p,
        "n_classes": n_classes,
        "d_in": D_in,
        "tk": tk,
    }


def model_wrapper_forward(images, kparams):
    """ModelWrapper.forward: preprocess (folded) -> encode_image -> pcbm(return_dist=False)."""
    B, C, H, W = images.shape
    D_in = C * H * W
    tk = kparams["tk"]
    D_in_pad = kparams["w_enc"].shape[0]

    # flatten NCHW row-major (channel-major, matching torch flatten), pad batch to a sublane
    # multiple and the reduction dim to the K tile, cast activations to bf16.
    x = images.reshape(B, D_in)
    tb = min(128, _round_up(B, 8))
    B_pad = _round_up(B, tb)
    x_pad = jnp.zeros((B_pad, D_in_pad), jnp.float32).at[:B, :D_in].set(x)
    x_pad = x_pad.astype(jnp.bfloat16)

    out_pad = fused_forward(
        x_pad,
        kparams["w_enc"],
        kparams["b_enc"],
        kparams["w_pcbm"],
        kparams["b_cls"],
        tb=tb,
        tk=tk,
    )
    return out_pad[:B, : kparams["n_classes"]]


if __name__ == "__main__":
    key = jax.random.PRNGKey(0)
    kx, kp = jax.random.split(key)

    B, C, H, W = 2, 3, 16, 16            # resolution = 16 (inputs already at target size)
    d_embed, n_concepts, n_classes = 64, 32, 8

    images = jax.random.uniform(kx, (B, C, H, W), jnp.float32)   # RGB in [0, 1]
    params = make_params(kp, C, H, W, d_embed, n_concepts, n_classes)
    kparams = prepare_kernel_params(params, C, H, W, tk=256)

    out = jax.block_until_ready(model_wrapper_forward(images, kparams))
    assert out.shape == (B, n_classes)

    D_in = C * H * W
    x_flat = images.reshape(B, D_in)

    # --- reference 1: bf16-faithful (same folded operands, pure JAX) -> tight tolerance ---
    w_enc_bf = kparams["w_enc"][:D_in, :d_embed]
    b_enc_f = kparams["b_enc"][:, :d_embed]
    w_pcbm_bf = kparams["w_pcbm"][:d_embed, :n_classes]
    b_cls_f = kparams["b_cls"][:, :n_classes]
    feat_bf = (
        jnp.dot(x_flat.astype(jnp.bfloat16), w_enc_bf, preferred_element_type=jnp.float32)
        + b_enc_f
    )
    out_bf16_ref = (
        jnp.dot(feat_bf.astype(jnp.bfloat16), w_pcbm_bf, preferred_element_type=jnp.float32)
        + b_cls_f
    )
    assert jnp.allclose(out, out_bf16_ref, atol=2e-3, rtol=2e-3)

    # --- reference 2: full-precision unfused forward (original module semantics) ---
    mean_flat = jnp.repeat(jnp.asarray(CLIP_MEAN, jnp.float32), H * W)
    std_flat = jnp.repeat(jnp.asarray(CLIP_STD, jnp.float32), H * W)
    xn = (x_flat - mean_flat) / std_flat
    feat_f32 = xn @ params["w_enc"] + params["b_enc"]
    concepts = feat_f32 @ params["cvecs"].T
    out_f32_ref = concepts @ params["wcls"].T + params["b_cls"]
    assert jnp.allclose(out, out_f32_ref, atol=5e-2, rtol=5e-2)

    print("KERNEL_OK")
</pallas_src>

<mosaic_0001>
module attributes {stable_mosaic.version = 11 : i64} {
  func.func @fused_kernel(%arg0: i32, %arg1: i32, %arg2: memref<8x256xbf16, #tpu.memory_space<vmem>>, %arg3: memref<256x128xbf16, #tpu.memory_space<vmem>>, %arg4: memref<1x128xf32, #tpu.memory_space<vmem>>, %arg5: memref<128x128xbf16, #tpu.memory_space<vmem>>, %arg6: memref<1x128xf32, #tpu.memory_space<vmem>>, %arg7: memref<8x128xf32, #tpu.memory_space<vmem>>, %arg8: memref<8x128xf32, #tpu.memory_space<vmem>>) attributes {dimension_semantics = [#tpu.dimension_semantics<parallel>, #tpu.dimension_semantics<arbitrary>], iteration_bounds = array<i64: 1, 3>, scalar_prefetch = 0 : i64, scratch_operands = 1 : i64, tpu.core_type = #tpu.core_type<tc>, window_params = [{transform_indices = @transform_0, window_bounds = array<i64: 8, 256>}, {transform_indices = @transform_1, window_bounds = array<i64: 256, 128>}, {pipeline_mode = #tpu.pipeline_mode<synchronous>, transform_indices = @transform_2, window_bounds = array<i64: 1, 128>}, {pipeline_mode = #tpu.pipeline_mode<synchronous>, transform_indices = @transform_3, window_bounds = array<i64: 128, 128>}, {pipeline_mode = #tpu.pipeline_mode<synchronous>, transform_indices = @transform_4, window_bounds = array<i64: 1, 128>}, {transform_indices = @transform_5, window_bounds = array<i64: 8, 128>}]} {
    %c0_i32 = arith.constant 0 : i32
    %0 = arith.cmpi eq, %arg1, %c0_i32 : i32
    %1 = arith.extui %0 : i1 to i32
    %c0_i32_0 = arith.constant 0 : i32
    %2 = arith.cmpi ne, %1, %c0_i32_0 : i32
    scf.if %2 {
      %cst_9 = arith.constant 0.000000e+00 : f32
      %12 = vector.broadcast %cst_9 : f32 to vector<8x128xf32>
      %c0_10 = arith.constant 0 : index
      %c0_11 = arith.constant 0 : index
      %13 = vector.load %arg8[%c0_10, %c0_11] : memref<8x128xf32, #tpu.memory_space<vmem>>, vector<8x128xf32>
      tpu.vector_store %arg8[%c0_10, %c0_11], %12 {strides = array<i32>} : memref<8x128xf32, #tpu.memory_space<vmem>>, vector<8x128xf32>,
    } else {
    }
    %c0 = arith.constant 0 : index
    %c0_1 = arith.constant 0 : index
    %3 = vector.load %arg8[%c0, %c0_1] : memref<8x128xf32, #tpu.memory_space<vmem>>, vector<8x128xf32>
    %c0_2 = arith.constant 0 : index
    %c0_3 = arith.constant 0 : index
    %4 = vector.load %arg2[%c0_2, %c0_3] : memref<8x256xbf16, #tpu.memory_space<vmem>>, vector<8x256xbf16>
    %c0_4 = arith.constant 0 : index
    %c0_5 = arith.constant 0 : index
    %5 = vector.load %arg3[%c0_4, %c0_5] : memref<256x128xbf16, #tpu.memory_space<vmem>>, vector<256x128xbf16>
    %cst = arith.constant dense<0.000000e+00> : vector<8x128xf32>
    %6 = tpu.matmul %4, %5, %cst {dimension_numbers = #tpu.dot_dimension_numbers<[1], [0], [0], [1], [0, 0, 1, 1], [], []>} : vector<8x256xbf16>, vector<256x128xbf16>, vector<8x128xf32> -> vector<8x128xf32>
    %7 = arith.addf %3, %6 : vector<8x128xf32>
    %c0_6 = arith.constant 0 : index
    %c0_7 = arith.constant 0 : index
    %8 = vector.load %arg8[%c0_6, %c0_7] : memref<8x128xf32, #tpu.memory_space<vmem>>, vector<8x128xf32>
    tpu.vector_store %arg8[%c0_6, %c0_7], %7 {strides = array<i32>} : memref<8x128xf32, #tpu.memory_space<vmem>>, vector<8x128xf32>,
    %c2_i32 = arith.constant 2 : i32
    %9 = arith.cmpi eq, %arg1, %c2_i32 : i32
    %10 = arith.extui %9 : i1 to i32
    %c0_i32_8 = arith.constant 0 : i32
    %11 = arith.cmpi ne, %10, %c0_i32_8 : i32
    scf.if %11 {
      %c0_9 = arith.constant 0 : index
      %c0_10 = arith.constant 0 : index
      %12 = vector.load %arg8[%c0_9, %c0_10] : memref<8x128xf32, #tpu.memory_space<vmem>>, vector<8x128xf32>
      %c0_11 = arith.constant 0 : index
      %c0_12 = arith.constant 0 : index
      %13 = vector.load %arg4[%c0_11, %c0_12] : memref<1x128xf32, #tpu.memory_space<vmem>>, vector<1x128xf32>
      %14 = vector.broadcast %13 : vector<1x128xf32> to vector<8x128xf32>
      %15 = arith.addf %12, %14 : vector<8x128xf32>
      %16 = arith.truncf %15 : vector<8x128xf32> to vector<8x128xbf16>
      %c0_13 = arith.constant 0 : index
      %c0_14 = arith.constant 0 : index
      %17 = vector.load %arg5[%c0_13, %c0_14] : memref<128x128xbf16, #tpu.memory_space<vmem>>, vector<128x128xbf16>
      %cst_15 = arith.constant dense<0.000000e+00> : vector<8x128xf32>
      %18 = tpu.matmul %16, %17, %cst_15 {dimension_numbers = #tpu.dot_dimension_numbers<[1], [0], [0], [1], [0, 0, 1, 1], [], []>} : vector<8x128xbf16>, vector<128x128xbf16>, vector<8x128xf32> -> vector<8x128xf32>
      %c0_16 = arith.constant 0 : index
      %c0_17 = arith.constant 0 : index
      %19 = vector.load %arg6[%c0_16, %c0_17] : memref<1x128xf32, #tpu.memory_space<vmem>>, vector<1x128xf32>
      %20 = vector.broadcast %19 : vector<1x128xf32> to vector<8x128xf32>
      %21 = arith.addf %18, %20 : vector<8x128xf32>
      %c0_18 = arith.constant 0 : index
      %c0_19 = arith.constant 0 : index
      %22 = vector.load %arg7[%c0_18, %c0_19] : memref<8x128xf32, #tpu.memory_space<vmem>>, vector<8x128xf32>
      tpu.vector_store %arg7[%c0_18, %c0_19], %21 {strides = array<i32>} : memref<8x128xf32, #tpu.memory_space<vmem>>, vector<8x128xf32>,
    } else {
    }
    return
  }
  func.func @transform_0(%arg0: i32, %arg1: i32) -> (i32, i32) {
    %c0_i32 = arith.constant 0 : i32
    return %arg0, %arg1 : i32, i32
  }
  func.func @transform_1(%arg0: i32, %arg1: i32) -> (i32, i32) {
    %c0_i32 = arith.constant 0 : i32
    %c0_i32_0 = arith.constant 0 : i32
    return %arg1, %c0_i32 : i32, i32
  }
  func.func @transform_2(%arg0: i32, %arg1: i32) -> (i32, i32) {
    %c0_i32 = arith.constant 0 : i32
    %c0_i32_0 = arith.constant 0 : i32
    %c0_i32_1 = arith.constant 0 : i32
    return %c0_i32, %c0_i32_0 : i32, i32
  }
  func.func @transform_3(%arg0: i32, %arg1: i32) -> (i32, i32) {
    %c0_i32 = arith.constant 0 : i32
    %c0_i32_0 = arith.constant 0 : i32
    %c0_i32_1 = arith.constant 0 : i32
    return %c0_i32, %c0_i32_0 : i32, i32
  }
  func.func @transform_4(%arg0: i32, %arg1: i32) -> (i32, i32) {
    %c0_i32 = arith.constant 0 : i32
    %c0_i32_0 = arith.constant 0 : i32
    %c0_i32_1 = arith.constant 0 : i32
    return %c0_i32, %c0_i32_0 : i32, i32
  }
  func.func @transform_5(%arg0: i32, %arg1: i32) -> (i32, i32) {
    %c0_i32 = arith.constant 0 : i32
    %c0_i32_0 = arith.constant 0 : i32
    return %arg0, %c0_i32 : i32, i32
  }
}

</mosaic_0001>

<llo_original>
// kernel: tpu_custom_call.1
$region0: #{tpu_custom_call.1}
  #allocation0 [shape = 'u32[]', space=smem, size = 0x4, offset = 0x4, fixed_abs, tag = 'smem constant byte address 0x4 - core index']
  #allocation1 [shape = 'u32[144,128]{1,0:T(1,128)}', space=vmem, size = 0x12000, scoped, tag = 'internal scratch']
  #allocation2 [shape = 'f32[8,128]{1,0:T(8,128)}', space=vmem, size = 0x1000, scoped, tag = 'scratch operand']
  %s0 = inlined_call_operand.hbm [shape: bf16[8,768], index: 0, kind: input, shape index: {}]
  %s1 = inlined_call_operand.hbm [shape: bf16[768,128], index: 1, kind: input, shape index: {}]
  %s2 = inlined_call_operand.vmem [shape: f32[1,128], index: 2, kind: input, shape index: {}]
  %s3 = inlined_call_operand.hbm [shape: bf16[128,128], index: 3, kind: input, shape index: {}]
  %s4 = inlined_call_operand.vmem [shape: f32[1,128], index: 4, kind: input, shape index: {}]
  %s5 = inlined_call_operand.hbm [shape: f32[8,128], index: 5, kind: output, shape index: {}]
  %s6 = sld [smem:[#allocation0]]
  $region73: #{tpu_custom_call.1} parent=0
    _
  %s8 = ssub.s32 1, %s6
  %s9 = scalar_select 0, %s8, %s6
  $region1: #{tpu_custom_call.1} parent=0
    #allocation3 [shape = 'u8[8192]{0}', space=vmem, size = 0x2000, scoped, tag = 'input window, operand 0']
    #allocation4 [shape = 's32[2]{0}', space=sflag, size = 0x8, scoped, tag = 'scoped memory for tpu_custom_call.1']
    #allocation5 [shape = 's32[2]{0}', space=sflag, size = 0x8, scoped, tag = 'scoped memory for tpu_custom_call.1']
    #allocation6 [shape = 'u8[131072]{0}', space=vmem, size = 0x20000, scoped, tag = 'input window, operand 1']
    #allocation7 [shape = 's32[2]{0}', space=sflag, size = 0x8, scoped, tag = 'scoped memory for tpu_custom_call.1']
    #allocation8 [shape = 'u8[32768]{0}', space=vmem, size = 0x8000, scoped, tag = 'input window, operand 3, single buffered']
    #allocation9 [shape = 'u8[4096]{0}', space=vmem, size = 0x1000, scoped, tag = 'output window, operand 0, single buffered']
    %10 = vsyncpa [#allocation4], 0
    %s11 = scalar_lea.sflag [#allocation4], 1
    %12 = vsyncpa %s11, 0
    %13 = vsyncpa [#allocation7], 0
    %s14 = scalar_lea.sflag [#allocation7], 1
    %15 = vsyncpa %s14, 0
    %16 = vsyncpa [#allocation5], 0
    loop: start=0, step=1, limit=5
    $region2: #{tpu_custom_call.1} parent=1 // loop_pre_header
      _
    $region3: #{tpu_custom_call.1} parent=1 // loop_header
      %s18 = sphi 0, %s22
      %p19 = scmp.ge.s32.totalorder %s18, 5
      %s25 = sphi 0, %s37
      %s26 = sphi 0, %s33
      %s27 = sphi 0, %s25
      %s28 = sphi 0, %s26
      %s29 = sphi 0, %s27
      %s30 = sphi 0, %s28
      %s42 = sphi 0, %s44
      %s45 = sphi 0, %s42
      %s46 = sphi 0, %s45
      %s62 = sphi 0, %s46
      %s68 = sphi 0, %s70
      %s71 = sphi 0, %s68
      %s72 = sphi 0, %s71
      %s88 = sphi 0, %s72
      %s92 = sphi 0, %s92
      %s94 = sphi 0, %s92
      %s95 = sphi 0, %s94
      %s109 = sphi 0, %s95
      %s113 = sphi 0, %s113
      %s115 = sphi 0, %s113
      %s116 = sphi 0, %s115
      %s130 = sphi 0, %s116
      %s134 = sphi 0, %s134
      %s136 = sphi 0, %s134
      %s137 = sphi 0, %s136
      %s151 = sphi 0, %s137
      %s157 = sphi 0, %s159
      %s160 = sphi 0, %s157
      %s161 = sphi 0, %s160
      %s177 = sphi 0, %s161
    $region4: #{tpu_custom_call.1} parent=1 // loop_header_branch
      %21 = sbr.rel (%p19) target = $region8
    $region5: #{tpu_custom_call.1} parent=1 // loop_body
      %s23 = ssub.s32 %s18, 1
      %s24 = ssub.s32 %s18, 2
      %s31 = sadd.s32 1, %s26
      %p32 = scmp.ge.s32.totalorder %s31, 3
      %s33 = scalar_select %p32, 0, %s31
      %s34 = sadd.s32 1, %s25
      %s35 = scalar_select %p32, %s34, %s25
      %p36 = scmp.ge.s32.totalorder %s35, 1
      %s37 = scalar_select %p36, 0, %s35
      %s38 = ssub.s32 %s25, %s37
      %s39 = ssub.s32 %s26, %s33
      %s40 = sor.u32 %s38, %s39
      %p41 = scmp.eq.s32.totalorder %s40, 0
      %s43 = sadd.s32 %s42, 1
      %s44 = scalar_select %p41, %s42, %s43
      %p47 = pneg %p41
      %p48 = scmp.eq.s32.totalorder %s18, 2
      %p49 = por %p47, %p48
      %p50 = scmp.ne.s32.totalorder %s42, %s45
      %p51 = scmp.eq.s32.totalorder %s18, 0
      %p52 = por %p50, %p51
      %p53 = scmp.ne.s32.totalorder %s42, %s45
      %p54 = scmp.eq.s32.totalorder %s23, 2
      %p55 = por %p53, %p54
      %p56 = scmp.ne.s32.totalorder %s45, %s46
      %p57 = scmp.eq.s32.totalorder %s23, 0
      %p58 = por %p56, %p57
      %p59 = scmp.ne.s32.totalorder %s45, %s46
      %p60 = scmp.eq.s32.totalorder %s24, 2
      %p61 = por %p59, %p60
      %p63 = scmp.ne.s32.totalorder %s46, %s62
      %p64 = scmp.eq.s32.totalorder %s24, 0
      %p65 = por %p63, %p64
      %s66 = ssub.s32 %s26, %s33
      %p67 = scmp.eq.s32.totalorder %s66, 0
      %s69 = sadd.s32 %s68, 1
      %s70 = scalar_select %p67, %s68, %s69
      %p73 = pneg %p67
      %p74 = scmp.eq.s32.totalorder %s18, 2
      %p75 = por %p73, %p74
      %p76 = scmp.ne.s32.totalorder %s68, %s71
      %p77 = scmp.eq.s32.totalorder %s18, 0
      %p78 = por %p76, %p77
      %p79 = scmp.ne.s32.totalorder %s68, %s71
      %p80 = scmp.eq.s32.totalorder %s23, 2
      %p81 = por %p79, %p80
      %p82 = scmp.ne.s32.totalorder %s71, %s72
      %p83 = scmp.eq.s32.totalorder %s23, 0
      %p84 = por %p82, %p83
      %p85 = scmp.ne.s32.totalorder %s71, %s72
      %p86 = scmp.eq.s32.totalorder %s24, 2
      %p87 = por %p85, %p86
      %p89 = scmp.ne.s32.totalorder %s72, %s88
      %p90 = scmp.eq.s32.totalorder %s24, 0
      %p91 = por %p89, %p90
      %s93 = sadd.s32 %s92, 1
      %p96 = scmp.eq.s32.totalorder %s18, 2
      %p97 = scmp.ne.s32.totalorder %s92, %s94
      %p98 = scmp.eq.s32.totalorder %s18, 0
      %p99 = por %p97, %p98
      %p100 = scmp.ne.s32.totalorder %s92, %s94
      %p101 = scmp.eq.s32.totalorder %s23, 2
      %p102 = por %p100, %p101
      %p103 = scmp.ne.s32.totalorder %s94, %s95
      %p104 = scmp.eq.s32.totalorder %s23, 0
      %p105 = por %p103, %p104
      %p106 = scmp.ne.s32.totalorder %s94, %s95
      %p107 = scmp.eq.s32.totalorder %s24, 2
      %p108 = por %p106, %p107
      %p110 = scmp.ne.s32.totalorder %s95, %s109
      %p111 = scmp.eq.s32.totalorder %s24, 0
      %p112 = por %p110, %p111
      %s114 = sadd.s32 %s113, 1
      %p117 = scmp.eq.s32.totalorder %s18, 2
      %p118 = scmp.ne.s32.totalorder %s113, %s115
      %p119 = scmp.eq.s32.totalorder %s18, 0
      %p120 = por %p118, %p119
      %p121 = scmp.ne.s32.totalorder %s113, %s115
      %p122 = scmp.eq.s32.totalorder %s23, 2
      %p123 = por %p121, %p122
      %p124 = scmp.ne.s32.totalorder %s115, %s116
      %p125 = scmp.eq.s32.totalorder %s23, 0
      %p126 = por %p124, %p125
      %p127 = scmp.ne.s32.totalorder %s115, %s116
      %p128 = scmp.eq.s32.totalorder %s24, 2
      %p129 = por %p127, %p128
      %p131 = scmp.ne.s32.totalorder %s116, %s130
      %p132 = scmp.eq.s32.totalorder %s24, 0
      %p133 = por %p131, %p132
      %s135 = sadd.s32 %s134, 1
      %p138 = scmp.eq.s32.totalorder %s18, 2
      %p139 = scmp.ne.s32.totalorder %s134, %s136
      %p140 = scmp.eq.s32.totalorder %s18, 0
      %p141 = por %p139, %p140
      %p142 = scmp.ne.s32.totalorder %s134, %s136
      %p143 = scmp.eq.s32.totalorder %s23, 2
      %p144 = por %p142, %p143
      %p145 = scmp.ne.s32.totalorder %s136, %s137
      %p146 = scmp.eq.s32.totalorder %s23, 0
      %p147 = por %p145, %p146
      %p148 = scmp.ne.s32.totalorder %s136, %s137
      %p149 = scmp.eq.s32.totalorder %s24, 2
      %p150 = por %p148, %p149
      %p152 = scmp.ne.s32.totalorder %s137, %s151
      %p153 = scmp.eq.s32.totalorder %s24, 0
      %p154 = por %p152, %p153
      %s155 = ssub.s32 %s25, %s37
      %p156 = scmp.eq.s32.totalorder %s155, 0
      %s158 = sadd.s32 %s157, 1
      %s159 = scalar_select %p156, %s157, %s158
      %p162 = pneg %p156
      %p163 = scmp.eq.s32.totalorder %s18, 2
      %p164 = por %p162, %p163
      %p165 = scmp.ne.s32.totalorder %s157, %s160
      %p166 = scmp.eq.s32.totalorder %s18, 0
      %p167 = por %p165, %p166
      %p168 = scmp.ne.s32.totalorder %s157, %s160
      %p169 = scmp.eq.s32.totalorder %s23, 2
      %p170 = por %p168, %p169
      %p171 = scmp.ne.s32.totalorder %s160, %s161
      %p172 = scmp.eq.s32.totalorder %s23, 0
      %p173 = por %p171, %p172
      %p174 = scmp.ne.s32.totalorder %s160, %s161
      %p175 = scmp.eq.s32.totalorder %s24, 2
      %p176 = por %p174, %p175
      %p178 = scmp.ne.s32.totalorder %s161, %s177
      %p179 = scmp.eq.s32.totalorder %s24, 0
      %p180 = por %p178, %p179
      %p181 = scmp.le.s32.totalorder 1, %s18
      %p182 = scmp.lt.s32.totalorder %s18, 4
      %p183 = pnand %p181, %p182
      %p184 = pneg %p183
      // Predicated region
      $region9: #{tpu_custom_call.1} parent=5 // pred_check
        _
      $region10: #{tpu_custom_call.1} parent=5 // pred_check_branch
        %186 = sbr.rel (%p183) target = $region12
      $region11: #{tpu_custom_call.1} parent=5 // pred_region
        %s187 = ssub.s32 %s18, 1
        // Predicated region
        $region13: #{tpu_custom_call.1} parent=11 // pred_check
          %p188 = pneg %p105
        $region14: #{tpu_custom_call.1} parent=11 // pred_check_branch
          %190 = sbr.rel (%p188) target = $region16
        $region15: #{tpu_custom_call.1} parent=11 // pred_region
          _
        $region16: #{tpu_custom_call.1} parent=11 // pred_fallthru
          _
        // Predicated region
        $region17: #{tpu_custom_call.1} parent=11 // pred_check
          %p191 = pneg %p126
        $region18: #{tpu_custom_call.1} parent=11 // pred_check_branch
          %193 = sbr.rel (%p191) target = $region20
        $region19: #{tpu_custom_call.1} parent=11 // pred_region
          %s195 = ssub.s32 1024, 1024
          %196 = vsyncadd [#allocation7], %s195
          %s197 = sshll.u32 [#allocation8], 4
          %s198 = int_to_ptr.vmem [resolvable:$true] %s197
          %203 = dma.hbm_to_vmem [thread:$0]  %s3, 1024, %s198, [#allocation7], 64, 64, 4
        $region20: #{tpu_custom_call.1} parent=11 // pred_fallthru
          _
        // Predicated region
        $region21: #{tpu_custom_call.1} parent=11 // pred_check
          %p204 = pneg %p147
        $region22: #{tpu_custom_call.1} parent=11 // pred_check_branch
          %206 = sbr.rel (%p204) target = $region24
        $region23: #{tpu_custom_call.1} parent=11 // pred_region
          _
        $region24: #{tpu_custom_call.1} parent=11 // pred_fallthru
          _
      $region12: #{tpu_custom_call.1} parent=5 // pred_fallthru
        _
      %p207 = scmp.lt.s32.totalorder %s18, 3
      // Predicated region
      $region25: #{tpu_custom_call.1} parent=5 // pred_check
        %p208 = pneg %p207
      $region26: #{tpu_custom_call.1} parent=5 // pred_check_branch
        %210 = sbr.rel (%p208) target = $region28
      $region27: #{tpu_custom_call.1} parent=5 // pred_region
        // Predicated region
        $region29: #{tpu_custom_call.1} parent=27 // pred_check
          %p211 = pneg %p52
        $region30: #{tpu_custom_call.1} parent=27 // pred_check_branch
          %213 = sbr.rel (%p211) target = $region32
        $region31: #{tpu_custom_call.1} parent=27 // pred_region
          %s214 = sand.u32 %s42, 1
          %s215 = scalar_lea.sflag [#allocation4], %s214
          %s216 = sand.u32 %s42, 1
          %s217 = smul.addr %s216, 8
          %s218 = scalar_lea.vmem [#allocation3], %s217
          %s219 = smul.u32 2, %s26
          %s221 = ssub.s32 128, 128
          %222 = vsyncadd %s215, %s221
          %s223 = smul.addr %s25, 6
          %s224 = sadd.s32 %s219, %s223
          %s225 = smul.addr %s224, 64
          %s226 = scalar_lea.hbm %s0, %s225
          %s228 = sshll.u32 %s218, 4
          %s229 = int_to_ptr.vmem [resolvable:$true] %s228
          %231 = dma.hbm_to_vmem [thread:$0]  %s226, 128, %s229, %s215
        $region32: #{tpu_custom_call.1} parent=27 // pred_fallthru
          _
        // Predicated region
        $region33: #{tpu_custom_call.1} parent=27 // pred_check
          %p232 = pneg %p78
        $region34: #{tpu_custom_call.1} parent=27 // pred_check_branch
          %234 = sbr.rel (%p232) target = $region36
        $region35: #{tpu_custom_call.1} parent=27 // pred_region
          %s235 = sand.u32 %s18, 1
          %s236 = scalar_lea.sflag [#allocation7], %s235
          %s237 = sand.u32 %s68, 1
          %s238 = smul.addr %s237, 128
          %s239 = scalar_lea.vmem [#allocation6], %s238
          %s240 = smul.u32 32, %s26
          %s242 = ssub.s32 2048, 2048
          %243 = vsyncadd %s236, %s242
          %s244 = smul.addr %s240, 64
          %s245 = scalar_lea.hbm %s1, %s244
          %s246 = sshll.u32 %s239, 4
          %s247 = int_to_ptr.vmem [resolvable:$true] %s246
          %252 = dma.hbm_to_vmem [thread:$0]  %s245, 2048, %s247, %s236, 64, 64, 4
        $region36: #{tpu_custom_call.1} parent=27 // pred_fallthru
          _
      $region28: #{tpu_custom_call.1} parent=5 // pred_fallthru
        _
      %p253 = scmp.le.s32.totalorder 1, %s18
      %p254 = scmp.lt.s32.totalorder %s18, 4
      %p255 = pnand %p253, %p254
      %p256 = pneg %p255
      // Predicated region
      $region37: #{tpu_custom_call.1} parent=5 // pred_check
        _
      $region38: #{tpu_custom_call.1} parent=5 // pred_check_branch
        %258 = sbr.rel (%p255) target = $region40
      $region39: #{tpu_custom_call.1} parent=5 // pred_region
        %s259 = ssub.s32 %s18, 1
        %s260 = sand.u32 %s45, 1
        %s261 = scalar_lea.sflag [#allocation4], %s260
        %s262 = sand.u32 %s45, 1
        %s263 = smul.addr %s262, 8
        %s264 = scalar_lea.vmem [#allocation3], %s263
        // Predicated region
        $region41: #{tpu_custom_call.1} parent=39 // pred_check
          %p265 = pneg %p58
        $region42: #{tpu_custom_call.1} parent=39 // pred_check_branch
          %267 = sbr.rel (%p265) target = $region44
        $region43: #{tpu_custom_call.1} parent=39 // pred_region
          %268 = dma.done %s261, 128
        $region44: #{tpu_custom_call.1} parent=39 // pred_fallthru
          _
        %s269 = sand.u32 %s23, 1
        %s270 = scalar_lea.sflag [#allocation7], %s269
        %s271 = sand.u32 %s71, 1
        %s272 = smul.addr %s271, 128
        %s273 = scalar_lea.vmem [#allocation6], %s272
        // Predicated region
        $region45: #{tpu_custom_call.1} parent=39 // pred_check
          %p274 = pneg %p84
        $region46: #{tpu_custom_call.1} parent=39 // pred_check_branch
          %276 = sbr.rel (%p274) target = $region48
        $region47: #{tpu_custom_call.1} parent=39 // pred_region
          %277 = dma.done %s270, 2048
        $region48: #{tpu_custom_call.1} parent=39 // pred_fallthru
          _
        // Predicated region
        $region49: #{tpu_custom_call.1} parent=39 // pred_check
          %p278 = pneg %p126
        $region50: #{tpu_custom_call.1} parent=39 // pred_check_branch
          %280 = sbr.rel (%p278) target = $region52
        $region51: #{tpu_custom_call.1} parent=39 // pred_region
          %281 = dma.done [#allocation7], 1024
        $region52: #{tpu_custom_call.1} parent=39 // pred_fallthru
          _
        %s282 = sand.u32 %s45, 1
        %s283 = scalar_lea.sflag [#allocation4], %s282
        %s284 = sand.u32 %s45, 1
        %s285 = smul.addr %s284, 8
        %s286 = scalar_lea.vmem [#allocation3], %s285
        %p287 = pneg %p58
        %p288 = pneg %p55
        %s289 = sand.u32 %s23, 1
        %s290 = scalar_lea.sflag [#allocation7], %s289
        %s291 = sand.u32 %s71, 1
        %s292 = smul.addr %s291, 128
        %s293 = scalar_lea.vmem [#allocation6], %s292
        %p294 = pneg %p84
        %p295 = pneg %p81
        %p296 = pneg %p105
        %p297 = pneg %p102
        %p298 = pneg %p126
        %p299 = pneg %p123
        %p300 = pneg %p147
        %p301 = pneg %p144
        %p302 = pneg %p173
        %p303 = pneg %p170
        %s304 = smul.u32 2, %s28
        %s305 = smul.u32 32, %s28
        %p307 = scmp.eq.s32.totalorder %s28, 0
        // Predicated region
        $region53: #{tpu_custom_call.1} parent=39 // pred_check
          %p308 = pneg %p307
        $region54: #{tpu_custom_call.1} parent=39 // pred_check_branch
          %310 = sbr.rel (%p308) target = $region56
        $region55: #{tpu_custom_call.1} parent=39 // pred_region
          %311 = vst [vmem:[#allocation2] sm:$0xff] 0.0
        $region56: #{tpu_custom_call.1} parent=39 // pred_fallthru
          _
        %v312 = vld [vmem:[#allocation2] sm:$0xff]
        %v313 = vld [vmem:[%s264] sm:$0xff]
        %v314 = vld [vmem:[%s273] sm:$0xf]
        %v315 = vld [vmem:[%s273 + $0x4] sm:$0xf]
        %v316 = vld [vmem:[%s273 + $0x8] sm:$0xf]
        %v317 = vld [vmem:[%s273 + $0xc] sm:$0xf]
        %v318 = vld [vmem:[%s273 + $0x10] sm:$0xf]
        %v319 = vld [vmem:[%s273 + $0x14] sm:$0xf]
        %v320 = vld [vmem:[%s273 + $0x18] sm:$0xf]
        %v321 = vld [vmem:[%s273 + $0x1c] sm:$0xf]
        %v322 = vld [vmem:[%s273 + $0x20] sm:$0xf]
        %v323 = vld [vmem:[%s273 + $0x24] sm:$0xf]
        %v324 = vld [vmem:[%s273 + $0x28] sm:$0xf]
        %v325 = vld [vmem:[%s273 + $0x2c] sm:$0xf]
        %v326 = vld [vmem:[%s273 + $0x30] sm:$0xf]
        %v327 = vld [vmem:[%s273 + $0x34] sm:$0xf]
        %v328 = vld [vmem:[%s273 + $0x38] sm:$0xf]
        %v329 = vld [vmem:[%s273 + $0x3c] sm:$0xf]
        %v330 = vld [vmem:[%s273 + $0x40] sm:$0xf]
        %v331 = vld [vmem:[%s273 + $0x44] sm:$0xf]
        %v332 = vld [vmem:[%s273 + $0x48] sm:$0xf]
        %v333 = vld [vmem:[%s273 + $0x4c] sm:$0xf]
        %v334 = vld [vmem:[%s273 + $0x50] sm:$0xf]
        %v335 = vld [vmem:[%s273 + $0x54] sm:$0xf]
        %v336 = vld [vmem:[%s273 + $0x58] sm:$0xf]
        %v337 = vld [vmem:[%s273 + $0x5c] sm:$0xf]
        %v338 = vld [vmem:[%s273 + $0x60] sm:$0xf]
        %v339 = vld [vmem:[%s273 + $0x64] sm:$0xf]
        %v340 = vld [vmem:[%s273 + $0x68] sm:$0xf]
        %v341 = vld [vmem:[%s273 + $0x6c] sm:$0xf]
        %v342 = vld [vmem:[%s273 + $0x70] sm:$0xf]
        %v343 = vld [vmem:[%s273 + $0x74] sm:$0xf]
        %v344 = vld [vmem:[%s273 + $0x78] sm:$0xf]
        %v345 = vld [vmem:[%s273 + $0x7c] sm:$0xf]
        %v347 = vunpack.c.l.b16 %v313
        %v348 = vunpack.c.h.b16 %v313
        %v349 = vpack.c.b16 %v347, %v347
        %v350 = vpack.c.b16 %v348, %v348
        %v385 = vunpack.c.l.b16 %v314
        %v386 = vunpack.c.l.b16 %v315
        %v387 = vunpack.c.l.b16 %v316
        %v388 = vunpack.c.l.b16 %v317
        %v389 = vunpack.c.l.b16 %v318
        %v390 = vunpack.c.l.b16 %v319
        %v391 = vunpack.c.l.b16 %v320
        %v392 = vunpack.c.l.b16 %v321
        %v393 = vunpack.c.l.b16 %v322
        %v394 = vunpack.c.l.b16 %v323
        %v395 = vunpack.c.l.b16 %v324
        %v396 = vunpack.c.l.b16 %v325
        %v397 = vunpack.c.l.b16 %v326
        %v398 = vunpack.c.l.b16 %v327
        %v399 = vunpack.c.l.b16 %v328
        %v400 = vunpack.c.l.b16 %v329
        %v401 = vunpack.c.l.b16 %v330
        %v402 = vunpack.c.l.b16 %v331
        %v403 = vunpack.c.l.b16 %v332
        %v404 = vunpack.c.l.b16 %v333
        %v405 = vunpack.c.l.b16 %v334
        %v406 = vunpack.c.l.b16 %v335
        %v407 = vunpack.c.l.b16 %v336
        %v408 = vunpack.c.l.b16 %v337
        %v409 = vunpack.c.l.b16 %v338
        %v410 = vunpack.c.l.b16 %v339
        %v411 = vunpack.c.l.b16 %v340
        %v412 = vunpack.c.l.b16 %v341
        %v413 = vunpack.c.l.b16 %v342
        %v414 = vunpack.c.l.b16 %v343
        %v415 = vunpack.c.l.b16 %v344
        %v416 = vunpack.c.l.b16 %v345
        %v417 = vpack.c.b16 %v386, %v385
        %v418 = vpack.c.b16 %v388, %v387
        %v419 = vpack.c.b16 %v390, %v389
        %v420 = vpack.c.b16 %v392, %v391
        %v421 = vpack.c.b16 %v394, %v393
        %v422 = vpack.c.b16 %v396, %v395
        %v423 = vpack.c.b16 %v398, %v397
        %v424 = vpack.c.b16 %v400, %v399
        %v425 = vpack.c.b16 %v402, %v401
        %v426 = vpack.c.b16 %v404, %v403
        %v427 = vpack.c.b16 %v406, %v405
        %v428 = vpack.c.b16 %v408, %v407
        %v429 = vpack.c.b16 %v410, %v409
        %v430 = vpack.c.b16 %v412, %v411
        %v431 = vpack.c.b16 %v414, %v413
        %v432 = vpack.c.b16 %v416, %v415
        %449 = vmatprep.subr.bf16.mxu0 0
        %450 = vmatpush1.bf16.msra.mxu0 %v417
        %451 = vmatprep.subr.bf16.mxu0 0
        %452 = vmatpush1.bf16.msra.mxu0 %v418
        %453 = vmatprep.subr.bf16.mxu0 0
        %454 = vmatpush1.bf16.msra.mxu0 %v419
        %455 = vmatprep.subr.bf16.mxu0 0
        %456 = vmatpush1.bf16.msra.mxu0 %v420
        %457 = vmatprep.subr.bf16.mxu0 0
        %458 = vmatpush1.bf16.msra.mxu0 %v421
        %459 = vmatprep.subr.bf16.mxu0 0
        %460 = vmatpush1.bf16.msra.mxu0 %v422
        %461 = vmatprep.subr.bf16.mxu0 0
        %462 = vmatpush1.bf16.msra.mxu0 %v423
        %463 = vmatprep.subr.bf16.mxu0 0
        %464 = vmatpush1.bf16.msra.mxu0 %v424
        %465 = vmatprep.subr.bf16.mxu0 0
        %466 = vmatpush1.bf16.msra.mxu0 %v425
        %467 = vmatprep.subr.bf16.mxu0 0
        %468 = vmatpush1.bf16.msra.mxu0 %v426
        %469 = vmatprep.subr.bf16.mxu0 0
        %470 = vmatpush1.bf16.msra.mxu0 %v427
        %471 = vmatprep.subr.bf16.mxu0 0
        %472 = vmatpush1.bf16.msra.mxu0 %v428
        %473 = vmatprep.subr.bf16.mxu0 0
        %474 = vmatpush1.bf16.msra.mxu0 %v429
        %475 = vmatprep.subr.bf16.mxu0 0
        %476 = vmatpush1.bf16.msra.mxu0 %v430
        %477 = vmatprep.subr.bf16.mxu0 0
        %478 = vmatpush1.bf16.msra.mxu0 %v431
        %479 = vmatprep.subr.bf16.mxu0 0
        %480 = vmatpush1.bf16.msra.mxu0 %v432
        %481 = vmatprep.mubr.bf16.mxu0 %v350
        %482 = vmatmul.mubr.bf16.gmra.mrb[0].mxu0 %v349
        %v483 = vpop.f32.mrb[0].mxu0
        %v484 = vadd.f32 0.0, %v483
        %v485 = vpop.f32.mrb[0].mxu0
        %v486 = vpop.f32.mrb[0].mxu0
        %v487 = vpop.f32.mrb[0].mxu0
        %488 = vdwg.mxu0
        %v489 = vadd.f32 %v312, %v484
        %490 = vst [vmem:[#allocation2] sm:$0xff] %v489
        %p491 = scmp.eq.s32.totalorder %s28, 2
        // Predicated region
        $region57: #{tpu_custom_call.1} parent=39 // pred_check
          %p492 = pneg %p491
        $region58: #{tpu_custom_call.1} parent=39 // pred_check_branch
          %494 = sbr.rel (%p492) target = $region60
        $region59: #{tpu_custom_call.1} parent=39 // pred_region
          %v495 = vld [vmem:[#allocation2] sm:$0xff]
          %v496 = vld [vmem:[%s2] sm:$0x1]
          %v498 = vlaneseq
          %v499 = vshrl.u32 %v498, 7
          %v500 = vsub.s32 0, %v499
          %v501 = vrot.slane %v496, %v500
          %v503 = vadd.f32 %v495, %v501
          %v504 = vpack.c.bf16 %v503, %v503
          %v505 = vld [vmem:[#allocation8] sm:$0xf]
          %v506 = vld [vmem:[#allocation8 + $0x4] sm:$0xf]
          %v507 = vld [vmem:[#allocation8 + $0x8] sm:$0xf]
          %v508 = vld [vmem:[#allocation8 + $0xc] sm:$0xf]
          %v509 = vld [vmem:[#allocation8 + $0x10] sm:$0xf]
          %v510 = vld [vmem:[#allocation8 + $0x14] sm:$0xf]
          %v511 = vld [vmem:[#allocation8 + $0x18] sm:$0xf]
          %v512 = vld [vmem:[#allocation8 + $0x1c] sm:$0xf]
          %v513 = vld [vmem:[#allocation8 + $0x20] sm:$0xf]
          %v514 = vld [vmem:[#allocation8 + $0x24] sm:$0xf]
          %v515 = vld [vmem:[#allocation8 + $0x28] sm:$0xf]
          %v516 = vld [vmem:[#allocation8 + $0x2c] sm:$0xf]
          %v517 = vld [vmem:[#allocation8 + $0x30] sm:$0xf]
          %v518 = vld [vmem:[#allocation8 + $0x34] sm:$0xf]
          %v519 = vld [vmem:[#allocation8 + $0x38] sm:$0xf]
          %v520 = vld [vmem:[#allocation8 + $0x3c] sm:$0xf]
          %v521 = vld [vmem:[%s4] sm:$0x1]
          %v523 = vlaneseq
          %v524 = vshrl.u32 %v523, 7
          %v525 = vsub.s32 0, %v524
          %v526 = vrot.slane %v521, %v525
          %v544 = vunpack.c.l.b16 %v505
          %v545 = vunpack.c.l.b16 %v506
          %v546 = vunpack.c.l.b16 %v507
          %v547 = vunpack.c.l.b16 %v508
          %v548 = vunpack.c.l.b16 %v509
          %v549 = vunpack.c.l.b16 %v510
          %v550 = vunpack.c.l.b16 %v511
          %v551 = vunpack.c.l.b16 %v512
          %v552 = vunpack.c.l.b16 %v513
          %v553 = vunpack.c.l.b16 %v514
          %v554 = vunpack.c.l.b16 %v515
          %v555 = vunpack.c.l.b16 %v516
          %v556 = vunpack.c.l.b16 %v517
          %v557 = vunpack.c.l.b16 %v518
          %v558 = vunpack.c.l.b16 %v519
          %v559 = vunpack.c.l.b16 %v520
          %v560 = vpack.c.b16 %v545, %v544
          %v561 = vpack.c.b16 %v547, %v546
          %v562 = vpack.c.b16 %v549, %v548
          %v563 = vpack.c.b16 %v551, %v550
          %v564 = vpack.c.b16 %v553, %v552
          %v565 = vpack.c.b16 %v555, %v554
          %v566 = vpack.c.b16 %v557, %v556
          %v567 = vpack.c.b16 %v559, %v558
          %576 = vmatprep.subr.bf16.mxu0 0
          %577 = vmatpush1.bf16.msra.mxu0 %v560
          %578 = vmatprep.subr.bf16.mxu0 0
          %579 = vmatpush1.bf16.msra.mxu0 %v561
          %580 = vmatprep.subr.bf16.mxu0 0
          %581 = vmatpush1.bf16.msra.mxu0 %v562
          %582 = vmatprep.subr.bf16.mxu0 0
          %583 = vmatpush1.bf16.msra.mxu0 %v563
          %584 = vmatprep.subr.bf16.mxu0 0
          %585 = vmatpush1.bf16.msra.mxu0 %v564
          %586 = vmatprep.subr.bf16.mxu0 0
          %587 = vmatpush1.bf16.msra.mxu0 %v565
          %588 = vmatprep.subr.bf16.mxu0 0
          %589 = vmatpush1.bf16.msra.mxu0 %v566
          %590 = vmatprep.subr.bf16.mxu0 0
          %591 = vmatpush1.bf16.msra.mxu0 %v567
          %592 = vmatprep.subr.bf16.mxu0 0
          %593 = vmatpush1.bf16.msra.mxu0 0
          %594 = vmatprep.subr.bf16.mxu0 0
          %595 = vmatpush1.bf16.msra.mxu0 0
          %596 = vmatprep.subr.bf16.mxu0 0
          %597 = vmatpush1.bf16.msra.mxu0 0
          %598 = vmatprep.subr.bf16.mxu0 0
          %599 = vmatpush1.bf16.msra.mxu0 0
          %600 = vmatprep.subr.bf16.mxu0 0
          %601 = vmatpush1.bf16.msra.mxu0 0
          %602 = vmatprep.subr.bf16.mxu0 0
          %603 = vmatpush1.bf16.msra.mxu0 0
          %604 = vmatprep.subr.bf16.mxu0 0
          %605 = vmatpush1.bf16.msra.mxu0 0
          %606 = vmatprep.subr.bf16.mxu0 0
          %607 = vmatpush1.bf16.msra.mxu0 0
          %608 = vmatprep.mubr.bf16.mxu0 0
          %609 = vmatmul.mubr.bf16.gmra.mrb[0].mxu0 %v504
          %v610 = vpop.f32.mrb[0].mxu0
          %v611 = vadd.f32 %v526, %v610
          %v612 = vpop.f32.mrb[0].mxu0
          %v613 = vpop.f32.mrb[0].mxu0
          %v614 = vpop.f32.mrb[0].mxu0
          %615 = vdwg.mxu0
          %616 = vst [vmem:[#allocation9] sm:$0xff] %v611
        $region60: #{tpu_custom_call.1} parent=39 // pred_fallthru
          _
        // Predicated region
        $region61: #{tpu_custom_call.1} parent=39 // pred_check
          %p617 = pneg %p170
        $region62: #{tpu_custom_call.1} parent=39 // pred_check_branch
          %619 = sbr.rel (%p617) target = $region64
        $region63: #{tpu_custom_call.1} parent=39 // pred_region
          %s621 = ssub.s32 128, 128
          %622 = vsyncadd [#allocation5], %s621
          %s623 = smul.addr %s27, 128
          %s624 = scalar_lea.hbm %s5, %s623
          %s626 = sshll.u32 [#allocation9], 4
          %s627 = int_to_ptr.vmem [resolvable:$true] %s626
          %629 = dma.vmem_to_hbm [thread:$0]  %s627, 128, %s624, [#allocation5]
        $region64: #{tpu_custom_call.1} parent=39 // pred_fallthru
          _
        // Predicated region
        $region65: #{tpu_custom_call.1} parent=39 // pred_check
          %p630 = pneg %p170
        $region66: #{tpu_custom_call.1} parent=39 // pred_check_branch
          %632 = sbr.rel (%p630) target = $region68
        $region67: #{tpu_custom_call.1} parent=39 // pred_region
          %633 = dma.done [#allocation5], 128
        $region68: #{tpu_custom_call.1} parent=39 // pred_fallthru
          _
      $region40: #{tpu_custom_call.1} parent=5 // pred_fallthru
        _
      %p634 = scmp.le.s32.totalorder 2, %s18
      // Predicated region
      $region69: #{tpu_custom_call.1} parent=5 // pred_check
        %p635 = pneg %p634
      $region70: #{tpu_custom_call.1} parent=5 // pred_check_branch
        %637 = sbr.rel (%p635) target = $region72
      $region71: #{tpu_custom_call.1} parent=5 // pred_region
        %s638 = ssub.s32 %s18, 2
      $region72: #{tpu_custom_call.1} parent=5 // pred_fallthru
        _
    $region6: #{tpu_custom_call.1} parent=1 // loop_footer
      %s22 = sadd.s32 1, %s18
    $region7: #{tpu_custom_call.1} parent=1 // loop_footer_branch
      %17 = sbr.rel target = $region3
    $region8: #{tpu_custom_call.1} parent=1 // loop_exit
      _
    %639 = vsyncpa [#allocation4], 1
    %s640 = scalar_lea.sflag [#allocation4], 1
    %641 = vsyncpa %s640, 1
    %642 = vsyncpa [#allocation7], 1
    %s643 = scalar_lea.sflag [#allocation7], 1
    %644 = vsyncpa %s643, 1
    %645 = vsyncpa [#allocation5], 1
    %s646 = scalar_lea.sflag [#allocation5], 1
    %647 = vsyncpa %s646, 1

</llo_original>
